<compile_context>
chip_gen: v5e
topology: v5e:2x2
jax: 0.10.0
libtpu: 0.0.40
codegen_flags: <defaults>
</compile_context>

<pallas_src>
import functools

import jax
import jax.numpy as jnp
from jax.experimental import pallas as pl
from jax.experimental.pallas import tpu as pltpu


def _ce2d_kernel(x_ref, t_ref, out_ref, acc_ref, *, hw, tw, tiles_per_split,
                 needs_mask):
    """One grid step.

    x_ref:   (NB, C, TW) logits tile (pixels on lanes, classes on sublanes).
    t_ref:   (NB, 1, TW) narrow-int targets.
    out_ref: (1, 1)      per-(batch-group, split) partial loss sum.
    acc_ref: (NB, TW)    f32 running per-pixel loss accumulator.
    """
    s = pl.program_id(1)
    j = pl.program_id(2)

    @pl.when(j == 0)
    def _():
        acc_ref[...] = jnp.zeros_like(acc_ref)

    x = x_ref[...].astype(jnp.float32)             # (NB, C, TW)
    t = t_ref[...].astype(jnp.int32)               # (NB, 1, TW)

    # Stable log-sum-exp over the (small) class/sublane axis.
    m = jnp.max(x, axis=1, keepdims=True)                        # (NB, 1, TW)
    lse = jnp.log(jnp.sum(jnp.exp(x - m), axis=1)) + m[:, 0, :]   # (NB, TW)

    # Target-class logit via compare + select (no one-hot float matmul).
    class_iota = jax.lax.broadcasted_iota(jnp.int32, x.shape, 1)
    tgt_logit = jnp.sum(jnp.where(class_iota == t, x, 0.0), axis=1)  # (NB, TW)

    # Per-pixel NLL of log-softmax: -(x_t - lse) = lse - x_t.
    loss = lse - tgt_logit                                        # (NB, TW)

    if needs_mask:
        # Only partial / out-of-range tiles pay for the mask (pl.when-gated),
        # full tiles take the cheap branch at runtime.
        tile_start = (s * tiles_per_split + j) * tw
        is_full = tile_start + tw <= hw

        @pl.when(is_full)
        def _():
            acc_ref[...] += loss

        @pl.when(jnp.logical_not(is_full))
        def _():
            lane = jax.lax.broadcasted_iota(jnp.int32, loss.shape, 1)
            valid = (tile_start + lane) < hw
            acc_ref[...] += jnp.where(valid, loss, 0.0)
    else:
        acc_ref[...] += loss

    @pl.when(j == pl.num_programs(2) - 1)
    def _():
        # Single cross-lane/sublane reduce per (batch group, split), epilogue only.
        out_ref[...] = jnp.sum(acc_ref[...], keepdims=True)


def _vmem_limit_bytes():
    phys = 64 * 1024 * 1024                         # conservative default (v7x)
    try:
        phys = int(pltpu.get_tpu_info().vmem_capacity_bytes)
    except Exception:
        pass
    phys = max(phys, 32 * 1024 * 1024)
    # v5e/v6e (128 MiB physical) -> 96 MiB scoped; v7x (64 MiB) -> 48 MiB.
    return min(96 * 1024 * 1024, (phys * 3) // 4)


def _largest_divisor_leq(n, cap):
    cap = max(1, min(n, int(cap)))
    for d in range(cap, 0, -1):
        if n % d == 0:
            return d
    return 1


def _plan(n, c, hw, logit_bytes, tgt_bytes, budget):
    """Returns (NB, tw, T, S, tiles_total, needs_mask) for grid (N//NB, S, T)."""
    per_px = c * logit_bytes + tgt_bytes
    row_bytes = hw * per_px
    if row_bytes <= budget:
        # Whole rows fit in one byte-budget step: fold batch rows, full HW tile.
        nb_cap = max(1, budget // row_bytes)
        if n >= 2:
            nb_cap = min(nb_cap, max(1, n // 2))    # keep >=2 parallel groups (v7x)
        nb = _largest_divisor_leq(n, nb_cap)
        return nb, hw, 1, 1, 1, False
    # Tile the pixel axis; tw is a multiple of 128, sized by the byte budget.
    tw = max(128, (budget // per_px) // 128 * 128)
    tw = min(tw, -(-hw // 128) * 128)
    tiles_total = -(-hw // tw)
    s = 2 if (n == 1 and tiles_total >= 2) else 1   # feed v7x's 2nd TensorCore
    t = -(-tiles_total // s)
    needs_mask = (tw * t * s != hw)
    return 1, tw, t, s, tiles_total, needs_mask


def cross_entropy_loss_2d(logits_nchw, targets_nhw, max_step_bytes=None):
    """mean over N*H*W pixels of -log_softmax(logits, dim=1)[target]."""
    n, c, h, w = logits_nchw.shape
    hw = h * w

    # Narrow targets to cut HBM traffic (widened in-kernel before the compare).
    if c <= 127:
        tgt_dtype = jnp.int8
    elif c <= 32767:
        tgt_dtype = jnp.int16
    else:
        tgt_dtype = jnp.int32

    logit_bytes = logits_nchw.dtype.itemsize
    tgt_bytes = jnp.dtype(tgt_dtype).itemsize

    vmem_limit = _vmem_limit_bytes()
    budget = max(1 << 20, min(8 << 20, vmem_limit // 6))
    if max_step_bytes is not None:                  # test / tuning override
        budget = min(budget, int(max_step_bytes))

    nb, tw, t_tiles, s_splits, tiles_total, needs_mask = _plan(
        n, c, hw, logit_bytes, tgt_bytes, budget)
    ng = n // nb

    # Free (contiguous) reshapes only — no transpose, no pad; logits dtype
    # (f32 or bf16) goes over the wire unchanged, the kernel upcasts.
    x = logits_nchw.reshape(n, c, hw)
    t = targets_nhw.reshape(n, 1, hw).astype(tgt_dtype)

    last_tile = tiles_total - 1

    def in_map(g, sp, j):
        # Clamp: splits that over-cover the tile range re-read the last tile,
        # whose contribution is fully masked out in-kernel.
        return (g, 0, jnp.minimum(sp * t_tiles + j, last_tile))

    kernel = functools.partial(_ce2d_kernel, hw=hw, tw=tw,
                               tiles_per_split=t_tiles, needs_mask=needs_mask)

    partials = pl.pallas_call(
        kernel,
        out_shape=jax.ShapeDtypeStruct((ng, s_splits, 1, 1), jnp.float32),
        grid_spec=pltpu.PrefetchScalarGridSpec(
            num_scalar_prefetch=0,
            grid=(ng, s_splits, t_tiles),
            in_specs=[
                pl.BlockSpec((nb, c, tw), in_map),
                pl.BlockSpec((nb, 1, tw), in_map),
            ],
            out_specs=pl.BlockSpec(
                (pl.Squeezed(), pl.Squeezed(), 1, 1),
                lambda g, sp, j: (g, sp, 0, 0)),
            scratch_shapes=[pltpu.VMEM((nb, tw), jnp.float32)],
        ),
        compiler_params=pltpu.CompilerParams(
            dimension_semantics=("parallel", "parallel", "arbitrary"),
            vmem_limit_bytes=int(vmem_limit)),
    )(x, t)

    # size_average=True, no class weights -> mean over all N*H*W pixels.
    return jnp.sum(partials) / jnp.float32(n * hw)


def _reference(logits_nchw, targets_nhw):
    # pure-JAX reference of F.nll_loss(F.log_softmax(x, dim=1), t) with mean.
    logp = jax.nn.log_softmax(logits_nchw.astype(jnp.float32), axis=1)
    tt = targets_nhw.astype(jnp.int32)
    gathered = jnp.take_along_axis(logp, tt[:, None, :, :], axis=1)[:, 0]
    return -jnp.mean(gathered)


if __name__ == "__main__":
    key = jax.random.PRNGKey(0)
    k1, k2, k3, k4 = jax.random.split(key, 4)

    # Main case (small segmentation-style input).
    n, c, h, w = 2, 4, 16, 16
    logits = jax.random.normal(k1, (n, c, h, w), dtype=jnp.float32)
    targets = jax.random.randint(k2, (n, h, w), 0, c, dtype=jnp.int32)
    loss = jax.block_until_ready(cross_entropy_loss_2d(logits, targets))
    ref = _reference(logits, targets)
    assert jnp.allclose(loss, ref, atol=1e-5, rtol=1e-5), (loss, ref)

    # Exercise the pixel-tiled / split / ragged-mask path with a tiny byte budget.
    n2, c2, h2, w2 = 1, 3, 15, 20
    logits2 = jax.random.normal(k3, (n2, c2, h2, w2), dtype=jnp.float32)
    targets2 = jax.random.randint(k4, (n2, h2, w2), 0, c2, dtype=jnp.int32)
    loss2 = jax.block_until_ready(
        cross_entropy_loss_2d(logits2, targets2, max_step_bytes=2048))
    ref2 = _reference(logits2, targets2)
    assert jnp.allclose(loss2, ref2, atol=1e-5, rtol=1e-5), (loss2, ref2)

    print("KERNEL_OK")
</pallas_src>

<mosaic_0001>
module attributes {stable_mosaic.version = 11 : i64} {
  func.func @_ce2d_kernel(%arg0: i32, %arg1: i32, %arg2: i32, %arg3: memref<1x4x256xf32, #tpu.memory_space<vmem>>, %arg4: memref<1x1x256xi8, #tpu.memory_space<vmem>>, %arg5: memref<1x1x1x1xf32, #tpu.memory_space<vmem>>, %arg6: memref<1x256xf32, #tpu.memory_space<vmem>>) attributes {dimension_semantics = [#tpu.dimension_semantics<parallel>, #tpu.dimension_semantics<parallel>, #tpu.dimension_semantics<arbitrary>], iteration_bounds = array<i64: 2, 1, 1>, scalar_prefetch = 0 : i64, scratch_operands = 1 : i64, tpu.core_type = #tpu.core_type<tc>, window_params = [{transform_indices = @transform_0, window_bounds = array<i64: 1, 4, 256>}, {transform_indices = @transform_1, window_bounds = array<i64: 1, 1, 256>}, {transform_indices = @transform_2, window_bounds = array<i64: 1, 1, 1, 1>}]} {
    %c0_i32 = arith.constant 0 : i32
    %0 = arith.cmpi eq, %arg2, %c0_i32 : i32
    %1 = arith.extui %0 : i1 to i32
    %c0_i32_0 = arith.constant 0 : i32
    %2 = arith.cmpi ne, %1, %c0_i32_0 : i32
    scf.if %2 {
      %cst_15 = arith.constant 0.000000e+00 : f32
      %28 = vector.broadcast %cst_15 : f32 to vector<1x256xf32>
      %c0_16 = arith.constant 0 : index
      %c0_17 = arith.constant 0 : index
      %29 = vector.load %arg6[%c0_16, %c0_17] : memref<1x256xf32, #tpu.memory_space<vmem>>, vector<1x256xf32>
      tpu.vector_store %arg6[%c0_16, %c0_17], %28 {strides = array<i32>} : memref<1x256xf32, #tpu.memory_space<vmem>>, vector<1x256xf32>,
    } else {
    }
    %c0 = arith.constant 0 : index
    %c0_1 = arith.constant 0 : index
    %c0_2 = arith.constant 0 : index
    %3 = vector.load %arg3[%c0, %c0_1, %c0_2] : memref<1x4x256xf32, #tpu.memory_space<vmem>>, vector<1x4x256xf32>
    %c0_3 = arith.constant 0 : index
    %c0_4 = arith.constant 0 : index
    %c0_5 = arith.constant 0 : index
    %4 = vector.load %arg4[%c0_3, %c0_4, %c0_5] : memref<1x1x256xi8, #tpu.memory_space<vmem>>, vector<1x1x256xi8>
    %5 = arith.extsi %4 : vector<1x1x256xi8> to vector<1x1x256xi32>
    %cst = arith.constant dense<0xFF800000> : vector<1x256xf32>
    %6 = vector.multi_reduction <maximumf>, %3, %cst [1] : vector<1x4x256xf32> to vector<1x256xf32>
    %7 = vector.shape_cast %6 : vector<1x256xf32> to vector<1x1x256xf32>
    %8 = vector.broadcast %7 : vector<1x1x256xf32> to vector<1x4x256xf32>
    %9 = arith.subf %3, %8 : vector<1x4x256xf32>
    %10 = math.exp %9 : vector<1x4x256xf32>
    %cst_6 = arith.constant dense<0.000000e+00> : vector<1x256xf32>
    %11 = vector.multi_reduction <add>, %10, %cst_6 [1] : vector<1x4x256xf32> to vector<1x256xf32>
    %12 = math.log %11 : vector<1x256xf32>
    %13 = vector.shape_cast %7 : vector<1x1x256xf32> to vector<1x256xf32>
    %14 = arith.addf %12, %13 : vector<1x256xf32>
    %15 = tpu.iota {dimensions = array<i32: 1>} : vector<1x4x256xi32>
    %16 = vector.broadcast %5 : vector<1x1x256xi32> to vector<1x4x256xi32>
    %17 = arith.cmpi eq, %15, %16 : vector<1x4x256xi32>
    %cst_7 = arith.constant 0.000000e+00 : f32
    %18 = vector.broadcast %cst_7 : f32 to vector<1x4x256xf32>
    %19 = arith.select %17, %3, %18 : vector<1x4x256xi1>, vector<1x4x256xf32>
    %cst_8 = arith.constant dense<0.000000e+00> : vector<1x256xf32>
    %20 = vector.multi_reduction <add>, %19, %cst_8 [1] : vector<1x4x256xf32> to vector<1x256xf32>
    %21 = arith.subf %14, %20 : vector<1x256xf32>
    %c0_9 = arith.constant 0 : index
    %c0_10 = arith.constant 0 : index
    %22 = vector.load %arg6[%c0_9, %c0_10] : memref<1x256xf32, #tpu.memory_space<vmem>>, vector<1x256xf32>
    %23 = arith.addf %22, %21 : vector<1x256xf32>
    %c0_11 = arith.constant 0 : index
    %c0_12 = arith.constant 0 : index
    %24 = vector.load %arg6[%c0_11, %c0_12] : memref<1x256xf32, #tpu.memory_space<vmem>>, vector<1x256xf32>
    tpu.vector_store %arg6[%c0_11, %c0_12], %23 {strides = array<i32>} : memref<1x256xf32, #tpu.memory_space<vmem>>, vector<1x256xf32>,
    %c0_i32_13 = arith.constant 0 : i32
    %25 = arith.cmpi eq, %arg2, %c0_i32_13 : i32
    %26 = arith.extui %25 : i1 to i32
    %c0_i32_14 = arith.constant 0 : i32
    %27 = arith.cmpi ne, %26, %c0_i32_14 : i32
    scf.if %27 {
      %c0_15 = arith.constant 0 : index
      %c0_16 = arith.constant 0 : index
      %28 = vector.load %arg6[%c0_15, %c0_16] : memref<1x256xf32, #tpu.memory_space<vmem>>, vector<1x256xf32>
      %29 = vector.shape_cast %28 : vector<1x256xf32> to vector<1x1x256xf32>
      %cst_17 = arith.constant dense<0.000000e+00> : vector<1xf32>
      %30 = vector.multi_reduction <add>, %29, %cst_17 [1, 2] : vector<1x1x256xf32> to vector<1xf32>
      %31 = vector.shape_cast %30 : vector<1xf32> to vector<1x1x1xf32>
      %32 = vector.extract %31[0, 0, 0] : f32 from vector<1x1x1xf32>
      %33 = vector.broadcast %32 : f32 to vector<1x1xf32>
      %c0_18 = arith.constant 0 : index
      %c0_19 = arith.constant 0 : index
      %c0_20 = arith.constant 0 : index
      %c0_21 = arith.constant 0 : index
      %34 = vector.load %arg5[%c0_18, %c0_19, %c0_20, %c0_21] : memref<1x1x1x1xf32, #tpu.memory_space<vmem>>, vector<1x1x1x1xf32>
      %35 = vector.shape_cast %34 : vector<1x1x1x1xf32> to vector<1x1xf32>
      %36 = vector.shape_cast %33 : vector<1x1xf32> to vector<1x1x1x1xf32>
      tpu.vector_store %arg5[%c0_18, %c0_19, %c0_20, %c0_21], %36 {strides = array<i32>} : memref<1x1x1x1xf32, #tpu.memory_space<vmem>>, vector<1x1x1x1xf32>,
    } else {
    }
    return
  }
  func.func @transform_0(%arg0: i32, %arg1: i32, %arg2: i32) -> (i32, i32, i32) {
    %c1_i32 = arith.constant 1 : i32
    %0 = arith.muli %arg1, %c1_i32 : i32
    %1 = arith.addi %0, %arg2 : i32
    %c0_i32 = arith.constant 0 : i32
    %2 = arith.minsi %1, %c0_i32 : i32
    %c0_i32_0 = arith.constant 0 : i32
    %c0_i32_1 = arith.constant 0 : i32
    return %arg0, %c0_i32_0, %2 : i32, i32, i32
  }
  func.func @transform_1(%arg0: i32, %arg1: i32, %arg2: i32) -> (i32, i32, i32) {
    %c1_i32 = arith.constant 1 : i32
    %0 = arith.muli %arg1, %c1_i32 : i32
    %1 = arith.addi %0, %arg2 : i32
    %c0_i32 = arith.constant 0 : i32
    %2 = arith.minsi %1, %c0_i32 : i32
    %c0_i32_0 = arith.constant 0 : i32
    %c0_i32_1 = arith.constant 0 : i32
    return %arg0, %c0_i32_0, %2 : i32, i32, i32
  }
  func.func @transform_2(%arg0: i32, %arg1: i32, %arg2: i32) -> (i32, i32, i32, i32) {
    %c0_i32 = arith.constant 0 : i32
    %c0_i32_0 = arith.constant 0 : i32
    %c0_i32_1 = arith.constant 0 : i32
    return %arg0, %arg1, %c0_i32, %c0_i32_0 : i32, i32, i32, i32
  }
}

</mosaic_0001>

<llo_original>
// kernel: tpu_custom_call.1
$region0: #{tpu_custom_call.1}
  #allocation0 [shape = 'u32[]', space=smem, size = 0x4, offset = 0x4, fixed_abs, tag = 'smem constant byte address 0x4 - core index']
  #allocation1 [shape = 'u32[72,128]{1,0:T(1,128)}', space=vmem, size = 0x9000, scoped, tag = 'internal scratch']
  #allocation2 [shape = 'f32[1,256]{1,0:T(1,128)}', space=vmem, size = 0x400, scoped, tag = 'scratch operand']
  %s0 = inlined_call_operand.hbm [shape: f32[2,4,256], index: 0, kind: input, shape index: {}]
  %s1 = inlined_call_operand.vmem [shape: s8[2,1,256], index: 1, kind: input, shape index: {}]
  %s2 = inlined_call_operand.vmem [shape: f32[2,1,1,1], index: 2, kind: output, shape index: {}]
  %s3 = sld [smem:[#allocation0]]
  $region53: #{tpu_custom_call.1} parent=0
    _
  %s5 = ssub.s32 1, %s3
  %s6 = scalar_select 0, %s5, %s3
  $region1: #{tpu_custom_call.1} parent=0
    #allocation3 [shape = 'u8[8192]{0}', space=vmem, size = 0x2000, scoped, tag = 'input window, operand 0']
    #allocation4 [shape = 's32[2]{0}', space=sflag, size = 0x8, scoped, tag = 'scoped memory for tpu_custom_call.1']
    %7 = vsyncpa [#allocation4], 0
    %s8 = scalar_lea.sflag [#allocation4], 1
    %9 = vsyncpa %s8, 0
    loop: start=0, step=1, limit=4
    $region2: #{tpu_custom_call.1} parent=1 // loop_pre_header
      _
    $region3: #{tpu_custom_call.1} parent=1 // loop_header
      %s11 = sphi 0, %s15
      %p12 = scmp.ge.s32.totalorder %s11, 4
      %s18 = sphi 0, %s37
      %s19 = sphi 0, %s33
      %s20 = sphi 0, %s29
      %s21 = sphi 0, %s18
      %s22 = sphi 0, %s19
      %s23 = sphi 0, %s20
      %s24 = sphi 0, %s21
      %s25 = sphi 0, %s22
      %s26 = sphi 0, %s23
      %s48 = sphi 0, %s50
      %s51 = sphi 0, %s48
      %s52 = sphi 0, %s51
      %s68 = sphi 0, %s52
      %s82 = sphi 0, %s84
      %s85 = sphi 0, %s82
      %s86 = sphi 0, %s85
      %s102 = sphi 0, %s86
      %s110 = sphi 0, %s112
      %s113 = sphi 0, %s110
      %s114 = sphi 0, %s113
      %s130 = sphi 0, %s114
    $region4: #{tpu_custom_call.1} parent=1 // loop_header_branch
      %14 = sbr.rel (%p12) target = $region8
    $region5: #{tpu_custom_call.1} parent=1 // loop_body
      %s16 = ssub.s32 %s11, 1
      %s17 = ssub.s32 %s11, 2
      %s27 = sadd.s32 1, %s20
      %p28 = scmp.ge.s32.totalorder %s27, 1
      %s29 = scalar_select %p28, 0, %s27
      %s30 = sadd.s32 1, %s19
      %s31 = scalar_select %p28, %s30, %s19
      %p32 = scmp.ge.s32.totalorder %s31, 1
      %s33 = scalar_select %p32, 0, %s31
      %s34 = sadd.s32 1, %s18
      %s35 = scalar_select %p32, %s34, %s18
      %p36 = scmp.ge.s32.totalorder %s35, 2
      %s37 = scalar_select %p36, 0, %s35
      %s38 = sadd.s32 %s19, %s20
      %p39 = scmp.lt.s32.totalorder %s38, 0
      %s40 = scalar_select %p39, %s38, 0
      %s41 = sadd.s32 %s33, %s29
      %p42 = scmp.lt.s32.totalorder %s41, 0
      %s43 = scalar_select %p42, %s41, 0
      %s44 = ssub.s32 %s18, %s37
      %s45 = ssub.s32 %s40, %s43
      %s46 = sor.u32 %s44, %s45
      %p47 = scmp.eq.s32.totalorder %s46, 0
      %s49 = sadd.s32 %s48, 1
      %s50 = scalar_select %p47, %s48, %s49
      %p53 = pneg %p47
      %p54 = scmp.eq.s32.totalorder %s11, 1
      %p55 = por %p53, %p54
      %p56 = scmp.ne.s32.totalorder %s48, %s51
      %p57 = scmp.eq.s32.totalorder %s11, 0
      %p58 = por %p56, %p57
      %p59 = scmp.ne.s32.totalorder %s48, %s51
      %p60 = scmp.eq.s32.totalorder %s16, 1
      %p61 = por %p59, %p60
      %p62 = scmp.ne.s32.totalorder %s51, %s52
      %p63 = scmp.eq.s32.totalorder %s16, 0
      %p64 = por %p62, %p63
      %p65 = scmp.ne.s32.totalorder %s51, %s52
      %p66 = scmp.eq.s32.totalorder %s17, 1
      %p67 = por %p65, %p66
      %p69 = scmp.ne.s32.totalorder %s52, %s68
      %p70 = scmp.eq.s32.totalorder %s17, 0
      %p71 = por %p69, %p70
      %s72 = sadd.s32 %s19, %s20
      %p73 = scmp.lt.s32.totalorder %s72, 0
      %s74 = scalar_select %p73, %s72, 0
      %s75 = sadd.s32 %s33, %s29
      %p76 = scmp.lt.s32.totalorder %s75, 0
      %s77 = scalar_select %p76, %s75, 0
      %s78 = ssub.s32 %s18, %s37
      %s79 = ssub.s32 %s74, %s77
      %s80 = sor.u32 %s78, %s79
      %p81 = scmp.eq.s32.totalorder %s80, 0
      %s83 = sadd.s32 %s82, 1
      %s84 = scalar_select %p81, %s82, %s83
      %p87 = pneg %p81
      %p88 = scmp.eq.s32.totalorder %s11, 1
      %p89 = por %p87, %p88
      %p90 = scmp.ne.s32.totalorder %s82, %s85
      %p91 = scmp.eq.s32.totalorder %s11, 0
      %p92 = por %p90, %p91
      %p93 = scmp.ne.s32.totalorder %s82, %s85
      %p94 = scmp.eq.s32.totalorder %s16, 1
      %p95 = por %p93, %p94
      %p96 = scmp.ne.s32.totalorder %s85, %s86
      %p97 = scmp.eq.s32.totalorder %s16, 0
      %p98 = por %p96, %p97
      %p99 = scmp.ne.s32.totalorder %s85, %s86
      %p100 = scmp.eq.s32.totalorder %s17, 1
      %p101 = por %p99, %p100
      %p103 = scmp.ne.s32.totalorder %s86, %s102
      %p104 = scmp.eq.s32.totalorder %s17, 0
      %p105 = por %p103, %p104
      %s106 = ssub.s32 %s18, %s37
      %s107 = ssub.s32 %s19, %s33
      %s108 = sor.u32 %s106, %s107
      %p109 = scmp.eq.s32.totalorder %s108, 0
      %s111 = sadd.s32 %s110, 1
      %s112 = scalar_select %p109, %s110, %s111
      %p115 = pneg %p109
      %p116 = scmp.eq.s32.totalorder %s11, 1
      %p117 = por %p115, %p116
      %p118 = scmp.ne.s32.totalorder %s110, %s113
      %p119 = scmp.eq.s32.totalorder %s11, 0
      %p120 = por %p118, %p119
      %p121 = scmp.ne.s32.totalorder %s110, %s113
      %p122 = scmp.eq.s32.totalorder %s16, 1
      %p123 = por %p121, %p122
      %p124 = scmp.ne.s32.totalorder %s113, %s114
      %p125 = scmp.eq.s32.totalorder %s16, 0
      %p126 = por %p124, %p125
      %p127 = scmp.ne.s32.totalorder %s113, %s114
      %p128 = scmp.eq.s32.totalorder %s17, 1
      %p129 = por %p127, %p128
      %p131 = scmp.ne.s32.totalorder %s114, %s130
      %p132 = scmp.eq.s32.totalorder %s17, 0
      %p133 = por %p131, %p132
      %p134 = scmp.le.s32.totalorder 1, %s11
      %p135 = scmp.lt.s32.totalorder %s11, 3
      %p136 = pnand %p134, %p135
      %p137 = pneg %p136
      // Predicated region
      $region9: #{tpu_custom_call.1} parent=5 // pred_check
        _
      $region10: #{tpu_custom_call.1} parent=5 // pred_check_branch
        %139 = sbr.rel (%p136) target = $region12
      $region11: #{tpu_custom_call.1} parent=5 // pred_region
        %s140 = ssub.s32 %s11, 1
      $region12: #{tpu_custom_call.1} parent=5 // pred_fallthru
        _
      %p141 = scmp.lt.s32.totalorder %s11, 2
      // Predicated region
      $region13: #{tpu_custom_call.1} parent=5 // pred_check
        %p142 = pneg %p141
      $region14: #{tpu_custom_call.1} parent=5 // pred_check_branch
        %144 = sbr.rel (%p142) target = $region16
      $region15: #{tpu_custom_call.1} parent=5 // pred_region
        // Predicated region
        $region17: #{tpu_custom_call.1} parent=15 // pred_check
          %p145 = pneg %p58
        $region18: #{tpu_custom_call.1} parent=15 // pred_check_branch
          %147 = sbr.rel (%p145) target = $region20
        $region19: #{tpu_custom_call.1} parent=15 // pred_region
          %s148 = sand.u32 %s48, 1
          %s149 = scalar_lea.sflag [#allocation4], %s148
          %s150 = sand.u32 %s48, 1
          %s151 = smul.addr %s150, 8
          %s152 = scalar_lea.vmem [#allocation3], %s151
          %s153 = sadd.s32 %s19, %s20
          %p154 = scmp.lt.s32.totalorder %s153, 0
          %s155 = scalar_select %p154, %s153, 0
          %s156 = smul.u32 2, %s155
          %158 = vsyncadd %s149, 0
          %s159 = smul.addr %s18, 2
          %s160 = sadd.s32 %s156, %s159
          %s161 = smul.addr %s160, 4
          %s162 = scalar_lea.hbm %s0, %s161
          %s164 = sshll.u32 %s162, 4
          %s165 = int_to_ptr.hbm [resolvable:$true] %s164
          %s166 = sshll.u32 %s152, 4
          %s167 = int_to_ptr.vmem [resolvable:$true] %s166
          %169 = dma.hbm_to_vmem [thread:$0]  %s165, 128, %s167, %s149
        $region20: #{tpu_custom_call.1} parent=15 // pred_fallthru
          _
        // Predicated region
        $region21: #{tpu_custom_call.1} parent=15 // pred_check
          %p170 = pneg %p92
        $region22: #{tpu_custom_call.1} parent=15 // pred_check_branch
          %172 = sbr.rel (%p170) target = $region24
        $region23: #{tpu_custom_call.1} parent=15 // pred_region
          %s173 = sadd.s32 %s19, %s20
          %p174 = scmp.lt.s32.totalorder %s173, 0
          %s175 = scalar_select %p174, %s173, 0
          %s176 = smul.u32 2, %s175
          %p177 = scmp.lt.s32.totalorder %s18, 1
          %s178 = scalar_select %p177, %s18, 1
          %p179 = scmp.lt.s32.totalorder %s176, 1
          %s180 = scalar_select %p179, %s176, 1
          %s181 = smul.addr %s178, 2
          %s182 = sadd.s32 %s180, %s181
          %s183 = scalar_lea.vmem %s1, %s182
          %s184 = sadd.s32 %s19, %s20
          %p185 = scmp.lt.s32.totalorder %s184, 0
          %s186 = scalar_select %p185, %s184, 0
          %s187 = smul.u32 2, %s186
        $region24: #{tpu_custom_call.1} parent=15 // pred_fallthru
          _
      $region16: #{tpu_custom_call.1} parent=5 // pred_fallthru
        _
      %p188 = scmp.le.s32.totalorder 1, %s11
      %p189 = scmp.lt.s32.totalorder %s11, 3
      %p190 = pnand %p188, %p189
      %p191 = pneg %p190
      // Predicated region
      $region25: #{tpu_custom_call.1} parent=5 // pred_check
        _
      $region26: #{tpu_custom_call.1} parent=5 // pred_check_branch
        %193 = sbr.rel (%p190) target = $region28
      $region27: #{tpu_custom_call.1} parent=5 // pred_region
        %s194 = ssub.s32 %s11, 1
        %s195 = sand.u32 %s51, 1
        %s196 = scalar_lea.sflag [#allocation4], %s195
        %s197 = sand.u32 %s51, 1
        %s198 = smul.addr %s197, 8
        %s199 = scalar_lea.vmem [#allocation3], %s198
        // Predicated region
        $region29: #{tpu_custom_call.1} parent=27 // pred_check
          %p200 = pneg %p64
        $region30: #{tpu_custom_call.1} parent=27 // pred_check_branch
          %202 = sbr.rel (%p200) target = $region32
        $region31: #{tpu_custom_call.1} parent=27 // pred_region
          %204 = dma.done %s196, 128
        $region32: #{tpu_custom_call.1} parent=27 // pred_fallthru
          _
        %s205 = sand.u32 %s51, 1
        %s206 = scalar_lea.sflag [#allocation4], %s205
        %s207 = sand.u32 %s51, 1
        %s208 = smul.addr %s207, 8
        %s209 = scalar_lea.vmem [#allocation3], %s208
        %p210 = pneg %p64
        %p211 = pneg %p61
        %s212 = sadd.s32 %s22, %s23
        %p213 = scmp.lt.s32.totalorder %s212, 0
        %s214 = scalar_select %p213, %s212, 0
        %s215 = smul.u32 2, %s214
        %p216 = scmp.lt.s32.totalorder %s21, 1
        %s217 = scalar_select %p216, %s21, 1
        %p218 = scmp.lt.s32.totalorder %s215, 1
        %s219 = scalar_select %p218, %s215, 1
        %s220 = smul.addr %s217, 2
        %s221 = sadd.s32 %s219, %s220
        %s222 = scalar_lea.vmem %s1, %s221
        %p223 = pneg %p98
        %p224 = pneg %p95
        %p225 = pneg %p126
        %p226 = pneg %p123
        %p227 = scmp.lt.s32.totalorder %s21, 1
        %s228 = scalar_select %p227, %s21, 1
        %p229 = scmp.lt.s32.totalorder %s22, 0
        %s230 = scalar_select %p229, %s22, 0
        %s231 = sadd.s32 %s230, %s228
        %s232 = scalar_lea.vmem %s2, %s231
        %s233 = sadd.s32 %s22, %s23
        %p234 = scmp.lt.s32.totalorder %s233, 0
        %s235 = scalar_select %p234, %s233, 0
        %s236 = smul.u32 2, %s235
        %s237 = sadd.s32 %s22, %s23
        %p238 = scmp.lt.s32.totalorder %s237, 0
        %s239 = scalar_select %p238, %s237, 0
        %s240 = smul.u32 2, %s239
        %p241 = scmp.lt.s32.totalorder %s21, 1
        %s242 = scalar_select %p241, %s21, 1
        %p243 = scmp.lt.s32.totalorder %s240, 1
        %s244 = scalar_select %p243, %s240, 1
        %s245 = smul.addr %s242, 2
        %s246 = sadd.s32 %s244, %s245
        %s247 = scalar_lea.vmem %s1, %s246
        %s248 = sadd.s32 %s22, %s23
        %p249 = scmp.lt.s32.totalorder %s248, 0
        %s250 = scalar_select %p249, %s248, 0
        %s251 = smul.u32 2, %s250
        %p252 = scmp.lt.s32.totalorder %s21, 1
        %s253 = scalar_select %p252, %s21, 1
        %p254 = scmp.lt.s32.totalorder %s22, 0
        %s255 = scalar_select %p254, %s22, 0
        %s256 = sadd.s32 %s255, %s253
        %s257 = scalar_lea.vmem %s2, %s256
        %p258 = scmp.eq.s32.totalorder %s23, 0
        // Predicated region
        $region33: #{tpu_custom_call.1} parent=27 // pred_check
          %p259 = pneg %p258
        $region34: #{tpu_custom_call.1} parent=27 // pred_check_branch
          %261 = sbr.rel (%p259) target = $region36
        $region35: #{tpu_custom_call.1} parent=27 // pred_region
          %v262 = vlaneseq
          %vm263 = vcmp.ge.s32.totalorder %v262, 0
          %vm264 = vcmp.lt.s32.totalorder %v262, 256
          %vm265 = vmand %vm263, %vm264
          %266 = vst.msk [vmem:[#allocation2] sm:$0x3] %vm265, 0.0
        $region36: #{tpu_custom_call.1} parent=27 // pred_fallthru
          _
        %v267 = vld [vmem:[%s199] sm:$0xff]
        %v268 = vld [vmem:[%s247] sm:$0x3]
        %v269 = vunpack.c.0.s8 %v268
        %271 = vst [vmem:[#allocation1] ss:$2 sm:$0xff] %v267
        %v272 = vld.sshfl [vmem:[#allocation1] sm:$0xff pattern:$0x75316420]
        %v273 = vld.sshfl [vmem:[#allocation1 + $0x8] sm:$0xff pattern:$0x75316420]
        %vm276 = vcmask 1043456
        %v277 = vsel %vm276, %v272, -inf
        %v278 = vrot.slane %v277, 4
        %v279 = vmax.f32 %v277, %v278
        %v280 = vrot.slane %v279, 2
        %v281 = vmax.f32 %v279, %v280
        %v282 = vrot.slane %v281, 1
        %v283 = vmax.f32 %v281, %v282
        %v284 = vsel %vm276, %v273, -inf
        %v285 = vrot.slane %v284, 4
        %v286 = vmax.f32 %v284, %v285
        %v287 = vrot.slane %v286, 2
        %v288 = vmax.f32 %v286, %v287
        %v289 = vrot.slane %v288, 1
        %v290 = vmax.f32 %v288, %v289
        %v293 = vrot.slane %v290, 4
        %v294 = vsel %vm276, %v283, %v293
        %v296 = vsub.f32 %v267, %v294
        %v297 = vmul.f32 %v296, 1.442695
        %v298 = vpow.pop %v297
        %300 = vst [vmem:[#allocation1] ss:$2 sm:$0xff] %v298
        %v301 = vld.sshfl [vmem:[#allocation1] sm:$0xff pattern:$0x75316420]
        %v302 = vld.sshfl [vmem:[#allocation1 + $0x8] sm:$0xff pattern:$0x75316420]
        %v305 = vsel %vm276, %v301, 0.0
        %v306 = vrot.slane %v305, 4
        %v307 = vadd.f32 %v305, %v306
        %v308 = vrot.slane %v307, 2
        %v309 = vadd.f32 %v307, %v308
        %v310 = vrot.slane %v309, 1
        %v311 = vadd.f32 %v309, %v310
        %v312 = vsel %vm276, %v302, 0.0
        %v313 = vrot.slane %v312, 4
        %v314 = vadd.f32 %v312, %v313
        %v315 = vrot.slane %v314, 2
        %v316 = vadd.f32 %v314, %v315
        %v317 = vrot.slane %v316, 1
        %v318 = vadd.f32 %v316, %v317
        %v319 = vlog2.pop %v311
        %v320 = vmul.f32 %v319, 0.6931472
        %v321 = vlog2.pop %v318
        %v322 = vmul.f32 %v321, 0.6931472
        %v323 = vadd.f32 %v320, %v283
        %v324 = vadd.f32 %v322, %v290
        %v325 = vlaneseq
        %v326 = vshrl.u32 %v325, 7
        %v327 = vperm.slane %v269, 0
        %v328 = vperm.slane %v269, 4
        %v329 = vperm.slane %v327, 0
        %v330 = vperm.slane %v328, 0
        %vm331 = vcmp.eq.s32.totalorder %v326, %v329
        %vm332 = vcmp.eq.s32.totalorder %v326, %v330
        %333 = vst [vmem:[#allocation1] ss:$2 sm:$0xff] %v267
        %v334 = vld.sshfl [vmem:[#allocation1] sm:$0xff pattern:$0x75316420]
        %v335 = vld.sshfl [vmem:[#allocation1 + $0x8] sm:$0xff pattern:$0x75316420]
        %v338 = vsel %vm331, %v334, 0.0
        %v339 = vsel %vm332, %v335, 0.0
        %v340 = vsel %vm276, %v338, 0.0
        %v341 = vrot.slane %v340, 4
        %v342 = vadd.f32 %v340, %v341
        %v343 = vrot.slane %v342, 2
        %v344 = vadd.f32 %v342, %v343
        %v345 = vrot.slane %v344, 1
        %v346 = vadd.f32 %v344, %v345
        %v347 = vsel %vm276, %v339, 0.0
        %v348 = vrot.slane %v347, 4
        %v349 = vadd.f32 %v347, %v348
        %v350 = vrot.slane %v349, 2
        %v351 = vadd.f32 %v349, %v350
        %v352 = vrot.slane %v351, 1
        %v353 = vadd.f32 %v351, %v352
        %v354 = vsub.f32 %v323, %v346
        %v355 = vsub.f32 %v324, %v353
        %v356 = vld [vmem:[#allocation2] sm:$0x3]
        %v359 = vrot.slane %v355, 7
        %vm360 = vcmask 1040384
        %v361 = vsel %vm360, %v354, %v359
        %v363 = vadd.f32 %v356, %v361
        %v364 = vlaneseq
        %vm365 = vcmp.ge.s32.totalorder %v364, 0
        %vm366 = vcmp.lt.s32.totalorder %v364, 256
        %vm367 = vmand %vm365, %vm366
        %368 = vst.msk [vmem:[#allocation2] sm:$0x3] %vm367, %v363
        // Predicated region
        $region37: #{tpu_custom_call.1} parent=27 // pred_check
          %p369 = pneg %p258
        $region38: #{tpu_custom_call.1} parent=27 // pred_check_branch
          %371 = sbr.rel (%p369) target = $region40
        $region39: #{tpu_custom_call.1} parent=27 // pred_region
          %v372 = vld [vmem:[#allocation2] sm:$0x3]
          %v374 = vperm.slane %v372, 0
          %v375 = vperm.slane %v372, 1
          %v378 = vsel %vm360, %v374, 0.0
          %v379 = vsel %vm360, %v375, 0.0
          %v380 = vadd.f32 %v378, %v379
          %381 = vadd.xlane.f32.xlu0 %v380
          %v382 = vpop.xlane.xlu0 %381
          %v383 = vrot.slane %v382, 4
          %v384 = vadd.f32 %v382, %v383
          %v385 = vrot.slane %v384, 2
          %v386 = vadd.f32 %v384, %v385
          %v387 = vrot.slane %v386, 1
          %v388 = vadd.f32 %v386, %v387
          %s389 = vtos %v388
          %v390 = vstv %s389
          %vm391 = vcmask 0
          %392 = vst.msk [vmem:[%s257] sm:$0x1] %vm391, %v390
        $region40: #{tpu_custom_call.1} parent=27 // pred_fallthru
          _
        %p393 = scmp.lt.s32.totalorder %s21, 1
        %s394 = scalar_select %p393, %s21, 1
        %p395 = scmp.lt.s32.totalorder %s22, 0
        %s396 = scalar_select %p395, %s22, 0
        %s397 = sadd.s32 %s396, %s394
        %s398 = scalar_lea.vmem %s2, %s397
        // Predicated region
        $region41: #{tpu_custom_call.1} parent=27 // pred_check
          %p399 = pneg %p123
        $region42: #{tpu_custom_call.1} parent=27 // pred_check_branch
          %401 = sbr.rel (%p399) target = $region44
        $region43: #{tpu_custom_call.1} parent=27 // pred_region
          _
        $region44: #{tpu_custom_call.1} parent=27 // pred_fallthru
          _
      $region28: #{tpu_custom_call.1} parent=5 // pred_fallthru
        _
      %p402 = scmp.le.s32.totalorder 2, %s11
      // Predicated region
      $region45: #{tpu_custom_call.1} parent=5 // pred_check
        %p403 = pneg %p402
      $region46: #{tpu_custom_call.1} parent=5 // pred_check_branch
        %405 = sbr.rel (%p403) target = $region48
      $region47: #{tpu_custom_call.1} parent=5 // pred_region
        %s406 = ssub.s32 %s11, 2
        // Predicated region
        $region49: #{tpu_custom_call.1} parent=47 // pred_check
          %p407 = pneg %p129
        $region50: #{tpu_custom_call.1} parent=47 // pred_check_branch
          %409 = sbr.rel (%p407) target = $region52
        $region51: #{tpu_custom_call.1} parent=47 // pred_region
          %p410 = scmp.lt.s32.totalorder %s24, 1
          %s411 = scalar_select %p410, %s24, 1
          %p412 = scmp.lt.s32.totalorder %s25, 0
          %s413 = scalar_select %p412, %s25, 0
          %s414 = sadd.s32 %s413, %s411
          %s415 = scalar_lea.vmem %s2, %s414
        $region52: #{tpu_custom_call.1} parent=47 // pred_fallthru
          _
      $region48: #{tpu_custom_call.1} parent=5 // pred_fallthru
        _
    $region6: #{tpu_custom_call.1} parent=1 // loop_footer
      %s15 = sadd.s32 1, %s11
    $region7: #{tpu_custom_call.1} parent=1 // loop_footer_branch
      %10 = sbr.rel target = $region3
    $region8: #{tpu_custom_call.1} parent=1 // loop_exit
      _
    %416 = vsyncpa [#allocation4], 1
    %s417 = scalar_lea.sflag [#allocation4], 1
    %418 = vsyncpa %s417, 1

</llo_original>
